<compile_context>
chip_gen: v7x
topology: tpu7x:2x2x1
jax: 0.10.0
libtpu: 0.0.40
codegen_flags: <defaults>
</compile_context>

<pallas_src>
import jax
import jax.numpy as jnp
from jax.experimental import pallas as pl
from jax.experimental.pallas import tpu as pltpu


def _round_up(x, m):
    return ((x + m - 1) // m) * m


def _gaussian_act_kernel(x_ref, o_ref):
    # x_ref / o_ref block: (8, tile_n) f32
    # rows: 0 = opacity, 1..3 = scales, 4..7 = quaternion components
    x = x_ref[...]
    row = jax.lax.broadcasted_iota(jnp.int32, x.shape, 0)   # sublane (feature) index

    # opacity: sigmoid (row 0) -- EUP work, free filler in a mem-bound kernel
    sig = jax.nn.sigmoid(x)
    # scales: exp (rows 1..3)
    ex = jnp.exp(x)
    # quaternions: L2-normalize over rows 4..7, per column (point)
    qsq = jnp.where(row >= 4, x * x, 0.0)
    norm = jnp.sqrt(jnp.sum(qsq, axis=0, keepdims=True))     # (1, tile_n) sublane reduce (XLU)
    inv = 1.0 / jnp.maximum(norm, 1e-12)                     # matches torch F.normalize eps
    qn = x * inv

    o_ref[...] = jnp.where(row == 0, sig, jnp.where(row < 4, ex, qn))


def gaussian_forward(positions, sh_features_dc, sh_features_rest, opacities,
                     scales, quaternions, *, tile_n=8192):
    N = positions.shape[0]
    dtype = positions.dtype

    # ---- pass-through / pure-layout outputs (no kernel traffic) -------------
    sh_features = jnp.concatenate([sh_features_dc, sh_features_rest], axis=1)

    # ---- pack compute arrays into one lane-dense [8, N] slab ----------------
    packed = jnp.concatenate(
        [opacities.reshape(N, 1), scales, quaternions], axis=1
    ).T                                                       # (8, N)

    tile_n = _round_up(max(tile_n, 128), 128)
    tile_n = min(tile_n, _round_up(N, 128))
    N_pad = _round_up(N, tile_n)
    if N_pad != N:
        packed = jnp.pad(packed, ((0, 0), (0, N_pad - N)))

    packed_out = pl.pallas_call(
        _gaussian_act_kernel,
        out_shape=jax.ShapeDtypeStruct((8, N_pad), dtype),
        grid_spec=pl.GridSpec(
            grid=(N_pad // tile_n,),
            in_specs=[pl.BlockSpec((8, tile_n), lambda i: (0, i))],
            out_specs=pl.BlockSpec((8, tile_n), lambda i: (0, i)),
        ),
        compiler_params=pltpu.CompilerParams(
            dimension_semantics=("parallel",)),               # megacore split on v7x
    )(packed)

    out_t = packed_out[:, :N].T                               # (N, 8)
    opac_o = out_t[:, 0:1]
    scale_o = out_t[:, 1:4]
    quat_o = out_t[:, 4:8]

    # TODO(synk): load_ply / reset_by_state_dict are host-side I/O & bookkeeping,
    # not part of the forward pass, and are intentionally not implemented here.
    return {
        "positions": positions,          # identity pass-through, never touches the kernel
        "sh_features": sh_features,      # (N, 16, 3)
        "opacities": opac_o,             # (N, 1)
        "quaternions": quat_o,           # (N, 4)
        "scales": scale_o,               # (N, 3)
    }


def _reference_forward(positions, sh_features_dc, sh_features_rest, opacities,
                       scales, quaternions):
    N = positions.shape[0]
    sh = jnp.concatenate([sh_features_dc, sh_features_rest], axis=1)
    opac = jax.nn.sigmoid(opacities.reshape(N, 1))
    sc = jnp.exp(scales)
    norm = jnp.sqrt(jnp.sum(quaternions * quaternions, axis=-1, keepdims=True))
    quat = quaternions / jnp.maximum(norm, 1e-12)
    return {
        "positions": positions,
        "sh_features": sh,
        "opacities": opac,
        "quaternions": quat,
        "scales": sc,
    }


if __name__ == "__main__":
    # Deterministic synthetic parameters (shapes follow GaussianModel / load_ply
    # with max_sh_degree=3).  N deliberately NOT a multiple of 128 to exercise
    # the ragged-N padding path.
    N = 1000
    key = jax.random.PRNGKey(0)
    k1, k2, k3, k4, k5, k6 = jax.random.split(key, 6)
    positions = jax.random.normal(k1, (N, 3), dtype=jnp.float32)
    sh_dc = jax.random.normal(k2, (N, 1, 3), dtype=jnp.float32)
    sh_rest = jax.random.normal(k3, (N, 15, 3), dtype=jnp.float32) * 0.1
    opacities = jax.random.normal(k4, (N, 1), dtype=jnp.float32)
    scales = jax.random.normal(k5, (N, 3), dtype=jnp.float32) * 0.5
    quaternions = jax.random.normal(k6, (N, 4), dtype=jnp.float32)

    out = gaussian_forward(positions, sh_dc, sh_rest, opacities, scales, quaternions)
    out = jax.tree_util.tree_map(jax.block_until_ready, out)

    ref = _reference_forward(positions, sh_dc, sh_rest, opacities, scales, quaternions)
    for name in ("positions", "sh_features", "opacities", "quaternions", "scales"):
        a, b = out[name], ref[name]
        assert a.shape == b.shape, (name, a.shape, b.shape)
        assert jnp.allclose(a, b, atol=1e-5, rtol=1e-5), name

    print("KERNEL_OK")
</pallas_src>

<mosaic_0001>
module attributes {stable_mosaic.version = 11 : i64} {
  func.func @_gaussian_act_kernel(%arg0: i32, %arg1: memref<8x1024xf32, #tpu.memory_space<vmem>>, %arg2: memref<8x1024xf32, #tpu.memory_space<vmem>>) attributes {dimension_semantics = [#tpu.dimension_semantics<parallel>], iteration_bounds = array<i64: 1>, scalar_prefetch = 0 : i64, scratch_operands = 0 : i64, tpu.core_type = #tpu.core_type<tc>, window_params = [{transform_indices = @transform_0, window_bounds = array<i64: 8, 1024>}, {transform_indices = @transform_1, window_bounds = array<i64: 8, 1024>}]} {
    %c0 = arith.constant 0 : index
    %c0_0 = arith.constant 0 : index
    %0 = vector.load %arg1[%c0, %c0_0] : memref<8x1024xf32, #tpu.memory_space<vmem>>, vector<8x1024xf32>
    %1 = tpu.iota {dimensions = array<i32: 0>} : vector<8x1024xi32>
    %2 = arith.negf %0 : vector<8x1024xf32>
    %3 = math.exp %2 : vector<8x1024xf32>
    %cst = arith.constant 1.000000e+00 : f32
    %4 = vector.broadcast %cst : f32 to vector<8x1024xf32>
    %5 = arith.addf %4, %3 : vector<8x1024xf32>
    %6 = arith.divf %4, %5 : vector<8x1024xf32>
    %7 = math.exp %0 : vector<8x1024xf32>
    %c4_i32 = arith.constant 4 : i32
    %8 = vector.broadcast %c4_i32 : i32 to vector<8x1024xi32>
    %9 = arith.cmpi sge, %1, %8 : vector<8x1024xi32>
    %10 = arith.mulf %0, %0 : vector<8x1024xf32>
    %cst_1 = arith.constant 0.000000e+00 : f32
    %11 = vector.broadcast %cst_1 : f32 to vector<8x1024xf32>
    %12 = arith.select %9, %10, %11 : vector<8x1024xi1>, vector<8x1024xf32>
    %cst_2 = arith.constant dense<0.000000e+00> : vector<1024xf32>
    %13 = vector.multi_reduction <add>, %12, %cst_2 [0] : vector<8x1024xf32> to vector<1024xf32>
    %14 = vector.shape_cast %13 : vector<1024xf32> to vector<1x1024xf32>
    %15 = math.sqrt %14 : vector<1x1024xf32>
    %cst_3 = arith.constant 9.99999996E-13 : f32
    %16 = vector.broadcast %cst_3 : f32 to vector<1x1024xf32>
    %17 = arith.maximumf %15, %16 : vector<1x1024xf32>
    %cst_4 = arith.constant 1.000000e+00 : f32
    %18 = vector.broadcast %cst_4 : f32 to vector<1x1024xf32>
    %19 = arith.divf %18, %17 : vector<1x1024xf32>
    %20 = vector.broadcast %19 : vector<1x1024xf32> to vector<8x1024xf32>
    %21 = arith.mulf %0, %20 : vector<8x1024xf32>
    %c0_i32 = arith.constant 0 : i32
    %22 = vector.broadcast %c0_i32 : i32 to vector<8x1024xi32>
    %23 = arith.cmpi eq, %1, %22 : vector<8x1024xi32>
    %c4_i32_5 = arith.constant 4 : i32
    %24 = vector.broadcast %c4_i32_5 : i32 to vector<8x1024xi32>
    %25 = arith.cmpi slt, %1, %24 : vector<8x1024xi32>
    %26 = arith.select %25, %7, %21 : vector<8x1024xi1>, vector<8x1024xf32>
    %27 = arith.select %23, %6, %26 : vector<8x1024xi1>, vector<8x1024xf32>
    %c0_6 = arith.constant 0 : index
    %c0_7 = arith.constant 0 : index
    %28 = vector.load %arg2[%c0_6, %c0_7] : memref<8x1024xf32, #tpu.memory_space<vmem>>, vector<8x1024xf32>
    tpu.vector_store %arg2[%c0_6, %c0_7], %27 {strides = array<i32>} : memref<8x1024xf32, #tpu.memory_space<vmem>>, vector<8x1024xf32>,
    return
  }
  func.func @transform_0(%arg0: i32) -> (i32, i32) {
    %c0_i32 = arith.constant 0 : i32
    %c0_i32_0 = arith.constant 0 : i32
    return %c0_i32, %arg0 : i32, i32
  }
  func.func @transform_1(%arg0: i32) -> (i32, i32) {
    %c0_i32 = arith.constant 0 : i32
    %c0_i32_0 = arith.constant 0 : i32
    return %c0_i32, %arg0 : i32, i32
  }
}

</mosaic_0001>

<llo_original>
// kernel: tpu_custom_call.1
$region0: #{tpu_custom_call.1}
  #allocation0 [shape = 'u32[]', space=smem, size = 0x4, offset = 0x4, fixed_abs, tag = 'smem constant byte address 0x4 - core index']
  #allocation1 [shape = 'u32[144,128]{1,0:T(1,128)}', space=vmem, size = 0x12000, scoped, tag = 'internal scratch']
  %s0 = inlined_call_operand.hbm [shape: f32[8,1024], index: 0, kind: input, shape index: {}]
  %s1 = inlined_call_operand.hbm [shape: f32[8,1024], index: 1, kind: output, shape index: {}]
  %s2 = sld [smem:[#allocation0]]
  $region18: #{tpu_custom_call.1} parent=0
    _
  %s4 = ssub.s32 1, %s2
  %s5 = scalar_select 0, %s4, %s2
  $region1: #{tpu_custom_call.1} parent=0
    #allocation2 [shape = 'u8[32768]{0}', space=vmem, size = 0x8000, scoped, tag = 'input window, operand 0, single buffered']
    #allocation3 [shape = 's32[1]{0}', space=sflag, size = 0x4, scoped, tag = 'scoped memory for tpu_custom_call.1']
    #allocation4 [shape = 's32[1]{0}', space=sflag, size = 0x4, scoped, tag = 'scoped memory for tpu_custom_call.1']
    #allocation5 [shape = 'u8[32768]{0}', space=vmem, size = 0x8000, scoped, tag = 'output window, operand 0, single buffered']
    %6 = vsyncpa [#allocation3], 0
    %7 = vsyncpa [#allocation4], 0
    // Predicated region
    $region2: #{tpu_custom_call.1} parent=1 // pred_check
      _
    $region3: #{tpu_custom_call.1} parent=1 // pred_check_branch
      %9 = sbr.rel (0) target = $region5
    $region4: #{tpu_custom_call.1} parent=1 // pred_region
      %s11 = ssub.s32 1024, 1024
      %12 = vsyncadd [#allocation3], %s11
      %s14 = sshll.u32 [#allocation2], 4
      %s15 = int_to_ptr.vmem [resolvable:$true] %s14
      %17 = dma.hbm_to_vmem [thread:$0]  %s0, 1024, %s15, [#allocation3]
    $region5: #{tpu_custom_call.1} parent=1 // pred_fallthru
      _
    // Predicated region
    $region6: #{tpu_custom_call.1} parent=1 // pred_check
      _
    $region7: #{tpu_custom_call.1} parent=1 // pred_check_branch
      %19 = sbr.rel (0) target = $region9
    $region8: #{tpu_custom_call.1} parent=1 // pred_region
      %20 = dma.done [#allocation3], 1024
    $region9: #{tpu_custom_call.1} parent=1 // pred_fallthru
      _
    %v21 = vld [vmem:[#allocation2] sm:$0xff]
    %v22 = vld [vmem:[#allocation2 + $0x8] sm:$0xff]
    %v23 = vld [vmem:[#allocation2 + $0x10] sm:$0xff]
    %v24 = vld [vmem:[#allocation2 + $0x18] sm:$0xff]
    %v25 = vld [vmem:[#allocation2 + $0x20] sm:$0xff]
    %v26 = vld [vmem:[#allocation2 + $0x28] sm:$0xff]
    %v27 = vld [vmem:[#allocation2 + $0x30] sm:$0xff]
    %v28 = vld [vmem:[#allocation2 + $0x38] sm:$0xff]
    %v29 = vlaneseq
    %v30 = vshrl.u32 %v29, 7
    %v31 = vxor.u32 %v21, 2147483648
    %v32 = vxor.u32 %v22, 2147483648
    %v33 = vxor.u32 %v23, 2147483648
    %v34 = vxor.u32 %v24, 2147483648
    %v35 = vxor.u32 %v25, 2147483648
    %v36 = vxor.u32 %v26, 2147483648
    %v37 = vxor.u32 %v27, 2147483648
    %v38 = vxor.u32 %v28, 2147483648
    %v39 = vmul.f32 %v31, 1.442695
    %v40 = vpow.pop %v39
    %v41 = vmul.f32 %v32, 1.442695
    %v42 = vpow.pop %v41
    %v43 = vmul.f32 %v33, 1.442695
    %v44 = vpow.pop %v43
    %v45 = vmul.f32 %v34, 1.442695
    %v46 = vpow.pop %v45
    %v47 = vmul.f32 %v35, 1.442695
    %v48 = vpow.pop %v47
    %v49 = vmul.f32 %v36, 1.442695
    %v50 = vpow.pop %v49
    %v51 = vmul.f32 %v37, 1.442695
    %v52 = vpow.pop %v51
    %v53 = vmul.f32 %v38, 1.442695
    %v54 = vpow.pop %v53
    %v55 = vadd.f32 %v40, 1.0
    %v56 = vadd.f32 %v42, 1.0
    %v57 = vadd.f32 %v44, 1.0
    %v58 = vadd.f32 %v46, 1.0
    %v59 = vadd.f32 %v48, 1.0
    %v60 = vadd.f32 %v50, 1.0
    %v61 = vadd.f32 %v52, 1.0
    %v62 = vadd.f32 %v54, 1.0
    %v63 = vrcp.pop %v55
    %v64 = vmul.f32 1.0, %v63
    %v65 = vrcp.pop %v56
    %v66 = vmul.f32 1.0, %v65
    %v67 = vrcp.pop %v57
    %v68 = vmul.f32 1.0, %v67
    %v69 = vrcp.pop %v58
    %v70 = vmul.f32 1.0, %v69
    %v71 = vrcp.pop %v59
    %v72 = vmul.f32 1.0, %v71
    %v73 = vrcp.pop %v60
    %v74 = vmul.f32 1.0, %v73
    %v75 = vrcp.pop %v61
    %v76 = vmul.f32 1.0, %v75
    %v77 = vrcp.pop %v62
    %v78 = vmul.f32 1.0, %v77
    %v79 = vmul.f32 %v21, 1.442695
    %v80 = vpow.pop %v79
    %v81 = vmul.f32 %v22, 1.442695
    %v82 = vpow.pop %v81
    %v83 = vmul.f32 %v23, 1.442695
    %v84 = vpow.pop %v83
    %v85 = vmul.f32 %v24, 1.442695
    %v86 = vpow.pop %v85
    %v87 = vmul.f32 %v25, 1.442695
    %v88 = vpow.pop %v87
    %v89 = vmul.f32 %v26, 1.442695
    %v90 = vpow.pop %v89
    %v91 = vmul.f32 %v27, 1.442695
    %v92 = vpow.pop %v91
    %v93 = vmul.f32 %v28, 1.442695
    %v94 = vpow.pop %v93
    %vm95 = vcmp.ge.s32.totalorder %v30, 4
    %v96 = vmul.f32 %v21, %v21
    %v97 = vmul.f32 %v22, %v22
    %v98 = vmul.f32 %v23, %v23
    %v99 = vmul.f32 %v24, %v24
    %v100 = vmul.f32 %v25, %v25
    %v101 = vmul.f32 %v26, %v26
    %v102 = vmul.f32 %v27, %v27
    %v103 = vmul.f32 %v28, %v28
    %v104 = vsel %vm95, %v96, 0.0
    %v105 = vsel %vm95, %v97, 0.0
    %v106 = vsel %vm95, %v98, 0.0
    %v107 = vsel %vm95, %v99, 0.0
    %v108 = vsel %vm95, %v100, 0.0
    %v109 = vsel %vm95, %v101, 0.0
    %v110 = vsel %vm95, %v102, 0.0
    %v111 = vsel %vm95, %v103, 0.0
    %v112 = vrot.slane %v104, 4
    %v113 = vadd.f32 %v104, %v112
    %v114 = vrot.slane %v113, 2
    %v115 = vadd.f32 %v113, %v114
    %v116 = vrot.slane %v115, 1
    %v117 = vadd.f32 %v115, %v116
    %v118 = vrot.slane %v105, 4
    %v119 = vadd.f32 %v105, %v118
    %v120 = vrot.slane %v119, 2
    %v121 = vadd.f32 %v119, %v120
    %v122 = vrot.slane %v121, 1
    %v123 = vadd.f32 %v121, %v122
    %v124 = vrot.slane %v106, 4
    %v125 = vadd.f32 %v106, %v124
    %v126 = vrot.slane %v125, 2
    %v127 = vadd.f32 %v125, %v126
    %v128 = vrot.slane %v127, 1
    %v129 = vadd.f32 %v127, %v128
    %v130 = vrot.slane %v107, 4
    %v131 = vadd.f32 %v107, %v130
    %v132 = vrot.slane %v131, 2
    %v133 = vadd.f32 %v131, %v132
    %v134 = vrot.slane %v133, 1
    %v135 = vadd.f32 %v133, %v134
    %v136 = vrot.slane %v108, 4
    %v137 = vadd.f32 %v108, %v136
    %v138 = vrot.slane %v137, 2
    %v139 = vadd.f32 %v137, %v138
    %v140 = vrot.slane %v139, 1
    %v141 = vadd.f32 %v139, %v140
    %v142 = vrot.slane %v109, 4
    %v143 = vadd.f32 %v109, %v142
    %v144 = vrot.slane %v143, 2
    %v145 = vadd.f32 %v143, %v144
    %v146 = vrot.slane %v145, 1
    %v147 = vadd.f32 %v145, %v146
    %v148 = vrot.slane %v110, 4
    %v149 = vadd.f32 %v110, %v148
    %v150 = vrot.slane %v149, 2
    %v151 = vadd.f32 %v149, %v150
    %v152 = vrot.slane %v151, 1
    %v153 = vadd.f32 %v151, %v152
    %v154 = vrot.slane %v111, 4
    %v155 = vadd.f32 %v111, %v154
    %v156 = vrot.slane %v155, 2
    %v157 = vadd.f32 %v155, %v156
    %v158 = vrot.slane %v157, 1
    %v159 = vadd.f32 %v157, %v158
    %v160 = vrsqrt.pop %v117
    %v161 = vmul.f32 %v117, %v160
    %vm162 = vcmp.eq.f32.partialorder %v117, inf
    %v163 = vsel %vm162, %v117, %v161
    %vm164 = vcmp.eq.f32.partialorder %v117, 0.0
    %v165 = vand.u32 %v117, 2147483648
    %v166 = vsel %vm164, %v165, %v163
    %v167 = vrsqrt.pop %v123
    %v168 = vmul.f32 %v123, %v167
    %vm169 = vcmp.eq.f32.partialorder %v123, inf
    %v170 = vsel %vm169, %v123, %v168
    %vm171 = vcmp.eq.f32.partialorder %v123, 0.0
    %v172 = vand.u32 %v123, 2147483648
    %v173 = vsel %vm171, %v172, %v170
    %v174 = vrsqrt.pop %v129
    %v175 = vmul.f32 %v129, %v174
    %vm176 = vcmp.eq.f32.partialorder %v129, inf
    %v177 = vsel %vm176, %v129, %v175
    %vm178 = vcmp.eq.f32.partialorder %v129, 0.0
    %v179 = vand.u32 %v129, 2147483648
    %v180 = vsel %vm178, %v179, %v177
    %v181 = vrsqrt.pop %v135
    %v182 = vmul.f32 %v135, %v181
    %vm183 = vcmp.eq.f32.partialorder %v135, inf
    %v184 = vsel %vm183, %v135, %v182
    %vm185 = vcmp.eq.f32.partialorder %v135, 0.0
    %v186 = vand.u32 %v135, 2147483648
    %v187 = vsel %vm185, %v186, %v184
    %v188 = vrsqrt.pop %v141
    %v189 = vmul.f32 %v141, %v188
    %vm190 = vcmp.eq.f32.partialorder %v141, inf
    %v191 = vsel %vm190, %v141, %v189
    %vm192 = vcmp.eq.f32.partialorder %v141, 0.0
    %v193 = vand.u32 %v141, 2147483648
    %v194 = vsel %vm192, %v193, %v191
    %v195 = vrsqrt.pop %v147
    %v196 = vmul.f32 %v147, %v195
    %vm197 = vcmp.eq.f32.partialorder %v147, inf
    %v198 = vsel %vm197, %v147, %v196
    %vm199 = vcmp.eq.f32.partialorder %v147, 0.0
    %v200 = vand.u32 %v147, 2147483648
    %v201 = vsel %vm199, %v200, %v198
    %v202 = vrsqrt.pop %v153
    %v203 = vmul.f32 %v153, %v202
    %vm204 = vcmp.eq.f32.partialorder %v153, inf
    %v205 = vsel %vm204, %v153, %v203
    %vm206 = vcmp.eq.f32.partialorder %v153, 0.0
    %v207 = vand.u32 %v153, 2147483648
    %v208 = vsel %vm206, %v207, %v205
    %v209 = vrsqrt.pop %v159
    %v210 = vmul.f32 %v159, %v209
    %vm211 = vcmp.eq.f32.partialorder %v159, inf
    %v212 = vsel %vm211, %v159, %v210
    %vm213 = vcmp.eq.f32.partialorder %v159, 0.0
    %v214 = vand.u32 %v159, 2147483648
    %v215 = vsel %vm213, %v214, %v212
    %v216 = vmax.f32 %v166, 1e-12
    %v217 = vmax.f32 %v173, 1e-12
    %v218 = vmax.f32 %v180, 1e-12
    %v219 = vmax.f32 %v187, 1e-12
    %v220 = vmax.f32 %v194, 1e-12
    %v221 = vmax.f32 %v201, 1e-12
    %v222 = vmax.f32 %v208, 1e-12
    %v223 = vmax.f32 %v215, 1e-12
    %v224 = vrcp.pop %v216
    %v225 = vmul.f32 1.0, %v224
    %v226 = vrcp.pop %v217
    %v227 = vmul.f32 1.0, %v226
    %v228 = vrcp.pop %v218
    %v229 = vmul.f32 1.0, %v228
    %v230 = vrcp.pop %v219
    %v231 = vmul.f32 1.0, %v230
    %v232 = vrcp.pop %v220
    %v233 = vmul.f32 1.0, %v232
    %v234 = vrcp.pop %v221
    %v235 = vmul.f32 1.0, %v234
    %v236 = vrcp.pop %v222
    %v237 = vmul.f32 1.0, %v236
    %v238 = vrcp.pop %v223
    %v239 = vmul.f32 1.0, %v238
    %v240 = vmul.f32 %v21, %v225
    %v241 = vmul.f32 %v22, %v227
    %v242 = vmul.f32 %v23, %v229
    %v243 = vmul.f32 %v24, %v231
    %v244 = vmul.f32 %v25, %v233
    %v245 = vmul.f32 %v26, %v235
    %v246 = vmul.f32 %v27, %v237
    %v247 = vmul.f32 %v28, %v239
    %vm248 = vcmp.eq.s32.totalorder %v30, 0
    %vm249 = vcmp.lt.s32.totalorder %v30, 4
    %v250 = vsel %vm249, %v80, %v240
    %v251 = vsel %vm249, %v82, %v241
    %v252 = vsel %vm249, %v84, %v242
    %v253 = vsel %vm249, %v86, %v243
    %v254 = vsel %vm249, %v88, %v244
    %v255 = vsel %vm249, %v90, %v245
    %v256 = vsel %vm249, %v92, %v246
    %v257 = vsel %vm249, %v94, %v247
    %v258 = vsel %vm248, %v64, %v250
    %v259 = vsel %vm248, %v66, %v251
    %v260 = vsel %vm248, %v68, %v252
    %v261 = vsel %vm248, %v70, %v253
    %v262 = vsel %vm248, %v72, %v254
    %v263 = vsel %vm248, %v74, %v255
    %v264 = vsel %vm248, %v76, %v256
    %v265 = vsel %vm248, %v78, %v257
    %266 = vst [vmem:[#allocation5] sm:$0xff] %v258
    %267 = vst [vmem:[#allocation5 + $0x8] sm:$0xff] %v259
    %268 = vst [vmem:[#allocation5 + $0x10] sm:$0xff] %v260
    %269 = vst [vmem:[#allocation5 + $0x18] sm:$0xff] %v261
    %270 = vst [vmem:[#allocation5 + $0x20] sm:$0xff] %v262
    %271 = vst [vmem:[#allocation5 + $0x28] sm:$0xff] %v263
    %272 = vst [vmem:[#allocation5 + $0x30] sm:$0xff] %v264
    %273 = vst [vmem:[#allocation5 + $0x38] sm:$0xff] %v265
    // Predicated region
    $region10: #{tpu_custom_call.1} parent=1 // pred_check
      _
    $region11: #{tpu_custom_call.1} parent=1 // pred_check_branch
      %275 = sbr.rel (0) target = $region13
    $region12: #{tpu_custom_call.1} parent=1 // pred_region
      %s277 = ssub.s32 1024, 1024
      %278 = vsyncadd [#allocation4], %s277
      %s280 = sshll.u32 [#allocation5], 4
      %s281 = int_to_ptr.vmem [resolvable:$true] %s280
      %283 = dma.vmem_to_hbm [thread:$0]  %s281, 1024, %s1, [#allocation4]
    $region13: #{tpu_custom_call.1} parent=1 // pred_fallthru
      _
    // Predicated region
    $region14: #{tpu_custom_call.1} parent=1 // pred_check
      _
    $region15: #{tpu_custom_call.1} parent=1 // pred_check_branch
      %285 = sbr.rel (0) target = $region17
    $region16: #{tpu_custom_call.1} parent=1 // pred_region
      %286 = dma.done [#allocation4], 1024
    $region17: #{tpu_custom_call.1} parent=1 // pred_fallthru
      _
    %287 = vsyncpa [#allocation3], 1
    %288 = vsyncpa [#allocation4], 1

</llo_original>
